<compile_context>
chip_gen: v7x
topology: tpu7x:2x2x1
jax: 0.10.0
libtpu: 0.0.40
codegen_flags: <defaults>
</compile_context>

<pallas_src>
from functools import partial

import jax
import jax.numpy as jnp
from jax.experimental import pallas as pl
from jax.experimental.pallas import tpu as pltpu


def _poly_loss_kernel(t_ref, x_ref, o_ref, *, eps, hw, tn, num_classes,
                      ignore_index):
    j = pl.program_id(1)

    x = x_ref[0].astype(jnp.float32)      # (C, tn) logits, C on sublanes
    t = t_ref[0]                          # (1, tn) int32 class ids

    C = num_classes

    # numerically-stable log-softmax over the class (sublane) axis
    m = jnp.max(x, axis=0, keepdims=True)                               # (1, tn)
    lse = m + jnp.log(jnp.sum(jnp.exp(x - m), axis=0, keepdims=True))   # (1, tn)
    logp = x - lse                                                      # (C, tn)

    # gather log p[target] per position via one-hot select over sublanes
    cls = jax.lax.broadcasted_iota(jnp.int32, (C, tn), 0)
    logpt = jnp.sum(jnp.where(cls == t, logp, 0.0), axis=0, keepdims=True)  # (1, tn)

    # poly loss:  -log p_t + eps * (1 - p_t)
    loss = -logpt + eps * (1.0 - jnp.exp(logpt))                        # (1, tn)

    # validity mask: spatial positions past H*W (edge tile) and, if enabled,
    # positions whose label equals ignore_index.
    pos = j * tn + jax.lax.broadcasted_iota(jnp.int32, (1, tn), 1)
    valid = pos < hw
    if 0 <= ignore_index < num_classes:
        valid = valid & (t != ignore_index)

    # jnp.where (not multiply) so NaN/Inf from garbage edge lanes cannot leak
    loss_sum = jnp.sum(jnp.where(valid, loss, 0.0))
    count = jnp.sum(valid.astype(jnp.float32))

    # pack the two per-tile scalars into one full (8,128) unmasked store:
    # sublanes 0-3 hold the loss partial, sublanes 4-7 hold the valid count.
    row = jax.lax.broadcasted_iota(jnp.int32, (8, 128), 0)
    o_ref[0, 0] = jnp.where(row < 4, loss_sum, count)


def poly_loss(pred, label, eps=2.0, ignore_index=-100, tn=None,
              vmem_input_budget_bytes=8 * 1024 * 1024):
    """pred: (N, C, H, W) float logits, label: (N, H, W) int class ids."""
    N, C, H, W = pred.shape
    HW = H * W

    # free reshapes: NCHW is already contiguous as (N, C, H*W)
    x = pred.reshape(N, C, HW)
    t = label.reshape(N, 1, HW).astype(jnp.int32)

    # auto-size the spatial (lane) tile against a double-buffered VMEM budget
    if tn is None:
        bytes_per_pos = C * x.dtype.itemsize + 4        # logits + int32 target
        tn = vmem_input_budget_bytes // (2 * bytes_per_pos)   # 2 = double-buffer
        tn = (tn // 128) * 128
        tn = max(512, min(tn, 32768))                   # lane-dense, sane range
    tn = min(tn, pl.cdiv(HW, 128) * 128)                # don't exceed spatial
    grid_j = pl.cdiv(HW, tn)

    grid = (N, grid_j)
    parts = pl.pallas_call(
        partial(_poly_loss_kernel, eps=float(eps), hw=HW, tn=tn,
                num_classes=C, ignore_index=int(ignore_index)),
        out_shape=jax.ShapeDtypeStruct((N, grid_j, 8, 128), jnp.float32),
        grid_spec=pltpu.PrefetchScalarGridSpec(
            num_scalar_prefetch=0,
            grid=grid,
            in_specs=[
                pl.BlockSpec((1, 1, tn), lambda n, j: (n, 0, j)),  # targets
                pl.BlockSpec((1, C, tn), lambda n, j: (n, 0, j)),  # logits
            ],
            out_specs=pl.BlockSpec((1, 1, 8, 128), lambda n, j: (n, j, 0, 0)),
        ),
        compiler_params=pltpu.CompilerParams(
            dimension_semantics=("parallel", "parallel"),
            vmem_limit_bytes=32 * 1024 * 1024,
        ),
    )(t, x)

    total = jnp.sum(parts[:, :, 0, 0])      # loss partials
    count = jnp.sum(parts[:, :, 4, 0])      # valid-position counts
    return total / count


def _reference(pred, label, eps=2.0):
    logp = jax.nn.log_softmax(pred, axis=1)
    logpt = jnp.take_along_axis(logp, label[:, None, :, :], axis=1)[:, 0]
    return jnp.mean(-logpt + eps * (1.0 - jnp.exp(logpt)))


if __name__ == "__main__":
    key = jax.random.PRNGKey(0)
    k1, k2, k3, k4 = jax.random.split(key, 4)

    # main small config
    N, C, H, W = 2, 4, 16, 16
    pred = jax.random.normal(k1, (N, C, H, W), dtype=jnp.float32)
    label = jax.random.randint(k2, (N, H, W), 0, C, dtype=jnp.int32)

    out = poly_loss(pred, label, eps=2.0)
    out = jax.block_until_ready(out)
    ref = _reference(pred, label, eps=2.0)
    assert jnp.allclose(out, ref, atol=1e-5, rtol=1e-5), (out, ref)

    # exercise the partial-tile (masked) path: H*W not a multiple of 128
    N2, C2, H2, W2 = 2, 4, 10, 13
    pred2 = jax.random.normal(k3, (N2, C2, H2, W2), dtype=jnp.float32)
    label2 = jax.random.randint(k4, (N2, H2, W2), 0, C2, dtype=jnp.int32)

    out2 = poly_loss(pred2, label2, eps=2.0)
    out2 = jax.block_until_ready(out2)
    ref2 = _reference(pred2, label2, eps=2.0)
    assert jnp.allclose(out2, ref2, atol=1e-5, rtol=1e-5), (out2, ref2)

    print("KERNEL_OK")
</pallas_src>

<mosaic_0001>
module attributes {stable_mosaic.version = 11 : i64} {
  func.func @_poly_loss_kernel(%arg0: i32, %arg1: i32, %arg2: memref<1x1x256xi32, #tpu.memory_space<vmem>>, %arg3: memref<1x4x256xf32, #tpu.memory_space<vmem>>, %arg4: memref<1x1x8x128xf32, #tpu.memory_space<vmem>>) attributes {dimension_semantics = [#tpu.dimension_semantics<parallel>, #tpu.dimension_semantics<parallel>], iteration_bounds = array<i64: 2, 1>, scalar_prefetch = 0 : i64, scratch_operands = 0 : i64, tpu.core_type = #tpu.core_type<tc>, window_params = [{transform_indices = @transform_0, window_bounds = array<i64: 1, 1, 256>}, {transform_indices = @transform_1, window_bounds = array<i64: 1, 4, 256>}, {transform_indices = @transform_2, window_bounds = array<i64: 1, 1, 8, 128>}]} {
    %c0 = arith.constant 0 : index
    %c0_0 = arith.constant 0 : index
    %c0_1 = arith.constant 0 : index
    %0 = vector.load %arg3[%c0, %c0_0, %c0_1] : memref<1x4x256xf32, #tpu.memory_space<vmem>>, vector<1x4x256xf32>
    %1 = vector.shape_cast %0 : vector<1x4x256xf32> to vector<4x256xf32>
    %c0_2 = arith.constant 0 : index
    %c0_3 = arith.constant 0 : index
    %c0_4 = arith.constant 0 : index
    %2 = vector.load %arg2[%c0_2, %c0_3, %c0_4] : memref<1x1x256xi32, #tpu.memory_space<vmem>>, vector<1x1x256xi32>
    %3 = vector.shape_cast %2 : vector<1x1x256xi32> to vector<1x256xi32>
    %cst = arith.constant dense<0xFF800000> : vector<256xf32>
    %4 = vector.multi_reduction <maximumf>, %1, %cst [0] : vector<4x256xf32> to vector<256xf32>
    %5 = vector.shape_cast %4 : vector<256xf32> to vector<1x256xf32>
    %6 = vector.broadcast %5 : vector<1x256xf32> to vector<4x256xf32>
    %7 = arith.subf %1, %6 : vector<4x256xf32>
    %8 = math.exp %7 : vector<4x256xf32>
    %cst_5 = arith.constant dense<0.000000e+00> : vector<256xf32>
    %9 = vector.multi_reduction <add>, %8, %cst_5 [0] : vector<4x256xf32> to vector<256xf32>
    %10 = vector.shape_cast %9 : vector<256xf32> to vector<1x256xf32>
    %11 = math.log %10 : vector<1x256xf32>
    %12 = arith.addf %5, %11 : vector<1x256xf32>
    %13 = vector.broadcast %12 : vector<1x256xf32> to vector<4x256xf32>
    %14 = arith.subf %1, %13 : vector<4x256xf32>
    %15 = tpu.iota {dimensions = array<i32: 0>} : vector<4x256xi32>
    %16 = vector.broadcast %3 : vector<1x256xi32> to vector<4x256xi32>
    %17 = arith.cmpi eq, %15, %16 : vector<4x256xi32>
    %cst_6 = arith.constant 0.000000e+00 : f32
    %18 = vector.broadcast %cst_6 : f32 to vector<4x256xf32>
    %19 = arith.select %17, %14, %18 : vector<4x256xi1>, vector<4x256xf32>
    %cst_7 = arith.constant dense<0.000000e+00> : vector<256xf32>
    %20 = vector.multi_reduction <add>, %19, %cst_7 [0] : vector<4x256xf32> to vector<256xf32>
    %21 = vector.shape_cast %20 : vector<256xf32> to vector<1x256xf32>
    %cst_8 = arith.constant 0.000000e+00 : f32
    %22 = vector.broadcast %cst_8 : f32 to vector<1x256xf32>
    %23 = arith.subf %22, %21 : vector<1x256xf32>
    %24 = math.exp %21 : vector<1x256xf32>
    %cst_9 = arith.constant 1.000000e+00 : f32
    %25 = vector.broadcast %cst_9 : f32 to vector<1x256xf32>
    %26 = arith.subf %25, %24 : vector<1x256xf32>
    %cst_10 = arith.constant 2.000000e+00 : f32
    %27 = vector.broadcast %cst_10 : f32 to vector<1x256xf32>
    %28 = arith.mulf %27, %26 : vector<1x256xf32>
    %29 = arith.addf %23, %28 : vector<1x256xf32>
    %c256_i32 = arith.constant 256 : i32
    %30 = arith.muli %arg1, %c256_i32 : i32
    %31 = tpu.iota {dimensions = array<i32: 1>} : vector<1x256xi32>
    %32 = vector.broadcast %30 : i32 to vector<1x256xi32>
    %33 = arith.addi %32, %31 : vector<1x256xi32>
    %c256_i32_11 = arith.constant 256 : i32
    %34 = vector.broadcast %c256_i32_11 : i32 to vector<1x256xi32>
    %35 = arith.cmpi slt, %33, %34 : vector<1x256xi32>
    %cst_12 = arith.constant 0.000000e+00 : f32
    %36 = vector.broadcast %cst_12 : f32 to vector<1x256xf32>
    %37 = arith.select %35, %29, %36 : vector<1x256xi1>, vector<1x256xf32>
    %38 = vector.shape_cast %37 : vector<1x256xf32> to vector<1x1x256xf32>
    %cst_13 = arith.constant dense<0.000000e+00> : vector<1xf32>
    %39 = vector.multi_reduction <add>, %38, %cst_13 [1, 2] : vector<1x1x256xf32> to vector<1xf32>
    %40 = vector.shape_cast %39 : vector<1xf32> to vector<1x1x1xf32>
    %41 = vector.extract %40[0, 0, 0] : f32 from vector<1x1x1xf32>
    %42 = arith.extui %35 : vector<1x256xi1> to vector<1x256xi32>
    %43 = arith.sitofp %42 : vector<1x256xi32> to vector<1x256xf32>
    %44 = vector.shape_cast %43 : vector<1x256xf32> to vector<1x1x256xf32>
    %cst_14 = arith.constant dense<0.000000e+00> : vector<1xf32>
    %45 = vector.multi_reduction <add>, %44, %cst_14 [1, 2] : vector<1x1x256xf32> to vector<1xf32>
    %46 = vector.shape_cast %45 : vector<1xf32> to vector<1x1x1xf32>
    %47 = vector.extract %46[0, 0, 0] : f32 from vector<1x1x1xf32>
    %48 = tpu.iota {dimensions = array<i32: 0>} : vector<8x128xi32>
    %c4_i32 = arith.constant 4 : i32
    %49 = vector.broadcast %c4_i32 : i32 to vector<8x128xi32>
    %50 = arith.cmpi slt, %48, %49 : vector<8x128xi32>
    %51 = vector.broadcast %41 : f32 to vector<8x128xf32>
    %52 = vector.broadcast %47 : f32 to vector<8x128xf32>
    %53 = arith.select %50, %51, %52 : vector<8x128xi1>, vector<8x128xf32>
    %c0_15 = arith.constant 0 : index
    %c0_16 = arith.constant 0 : index
    %c0_17 = arith.constant 0 : index
    %c0_18 = arith.constant 0 : index
    %54 = vector.load %arg4[%c0_15, %c0_16, %c0_17, %c0_18] : memref<1x1x8x128xf32, #tpu.memory_space<vmem>>, vector<1x1x8x128xf32>
    %55 = vector.shape_cast %54 : vector<1x1x8x128xf32> to vector<8x128xf32>
    %56 = vector.shape_cast %53 : vector<8x128xf32> to vector<1x1x8x128xf32>
    tpu.vector_store %arg4[%c0_15, %c0_16, %c0_17, %c0_18], %56 {strides = array<i32>} : memref<1x1x8x128xf32, #tpu.memory_space<vmem>>, vector<1x1x8x128xf32>,
    return
  }
  func.func @transform_0(%arg0: i32, %arg1: i32) -> (i32, i32, i32) {
    %c0_i32 = arith.constant 0 : i32
    %c0_i32_0 = arith.constant 0 : i32
    return %arg0, %c0_i32, %arg1 : i32, i32, i32
  }
  func.func @transform_1(%arg0: i32, %arg1: i32) -> (i32, i32, i32) {
    %c0_i32 = arith.constant 0 : i32
    %c0_i32_0 = arith.constant 0 : i32
    return %arg0, %c0_i32, %arg1 : i32, i32, i32
  }
  func.func @transform_2(%arg0: i32, %arg1: i32) -> (i32, i32, i32, i32) {
    %c0_i32 = arith.constant 0 : i32
    %c0_i32_0 = arith.constant 0 : i32
    %c0_i32_1 = arith.constant 0 : i32
    return %arg0, %arg1, %c0_i32, %c0_i32_0 : i32, i32, i32, i32
  }
}

</mosaic_0001>

<llo_original>
// kernel: tpu_custom_call.1
$region0: #{tpu_custom_call.1}
  #allocation0 [shape = 'u32[]', space=smem, size = 0x4, offset = 0x4, fixed_abs, tag = 'smem constant byte address 0x4 - core index']
  #allocation1 [shape = 'u32[144,128]{1,0:T(1,128)}', space=vmem, size = 0x12000, scoped, tag = 'internal scratch']
  %s0 = inlined_call_operand.hbm [shape: s32[2,1,256], index: 0, kind: input, shape index: {}]
  %s1 = inlined_call_operand.hbm [shape: f32[2,4,256], index: 1, kind: input, shape index: {}]
  %s2 = inlined_call_operand.hbm [shape: f32[2,1,8,128], index: 2, kind: output, shape index: {}]
  %s3 = sld [smem:[#allocation0]]
  $region49: #{tpu_custom_call.1} parent=0
    _
  %s5 = ssub.s32 1, %s3
  %s6 = scalar_select 0, %s5, %s3
  $region1: #{tpu_custom_call.1} parent=0
    #allocation2 [shape = 'u8[2048]{0}', space=vmem, size = 0x800, scoped, tag = 'input window, operand 0']
    #allocation3 [shape = 's32[2]{0}', space=sflag, size = 0x8, scoped, tag = 'scoped memory for tpu_custom_call.1']
    #allocation4 [shape = 's32[2]{0}', space=sflag, size = 0x8, scoped, tag = 'scoped memory for tpu_custom_call.1']
    #allocation5 [shape = 'u8[8192]{0}', space=vmem, size = 0x2000, scoped, tag = 'input window, operand 1']
    #allocation6 [shape = 's32[2]{0}', space=sflag, size = 0x8, scoped, tag = 'scoped memory for tpu_custom_call.1']
    #allocation7 [shape = 'u8[8192]{0}', space=vmem, size = 0x2000, scoped, tag = 'output window, operand 0']
    %7 = vsyncpa [#allocation3], 0
    %s8 = scalar_lea.sflag [#allocation3], 1
    %9 = vsyncpa %s8, 0
    %10 = vsyncpa [#allocation6], 0
    %s11 = scalar_lea.sflag [#allocation6], 1
    %12 = vsyncpa %s11, 0
    %13 = vsyncpa [#allocation4], 0
    %s14 = scalar_lea.sflag [#allocation4], 1
    %15 = vsyncpa %s14, 0
    loop: start=0, step=1, limit=4
    $region2: #{tpu_custom_call.1} parent=1 // loop_pre_header
      _
    $region3: #{tpu_custom_call.1} parent=1 // loop_header
      %s17 = sphi 0, %s21
      %p18 = scmp.ge.s32.totalorder %s17, 4
      %s24 = sphi 0, %s36
      %s25 = sphi 0, %s32
      %s26 = sphi 0, %s24
      %s27 = sphi 0, %s25
      %s28 = sphi 0, %s26
      %s29 = sphi 0, %s27
      %s41 = sphi 0, %s43
      %s44 = sphi 0, %s41
      %s45 = sphi 0, %s44
      %s61 = sphi 0, %s45
      %s69 = sphi 0, %s71
      %s72 = sphi 0, %s69
      %s73 = sphi 0, %s72
      %s89 = sphi 0, %s73
      %s97 = sphi 0, %s99
      %s100 = sphi 0, %s97
      %s101 = sphi 0, %s100
      %s117 = sphi 0, %s101
    $region4: #{tpu_custom_call.1} parent=1 // loop_header_branch
      %20 = sbr.rel (%p18) target = $region8
    $region5: #{tpu_custom_call.1} parent=1 // loop_body
      %s22 = ssub.s32 %s17, 1
      %s23 = ssub.s32 %s17, 2
      %s30 = sadd.s32 1, %s25
      %p31 = scmp.ge.s32.totalorder %s30, 1
      %s32 = scalar_select %p31, 0, %s30
      %s33 = sadd.s32 1, %s24
      %s34 = scalar_select %p31, %s33, %s24
      %p35 = scmp.ge.s32.totalorder %s34, 2
      %s36 = scalar_select %p35, 0, %s34
      %s37 = ssub.s32 %s24, %s36
      %s38 = ssub.s32 %s25, %s32
      %s39 = sor.u32 %s37, %s38
      %p40 = scmp.eq.s32.totalorder %s39, 0
      %s42 = sadd.s32 %s41, 1
      %s43 = scalar_select %p40, %s41, %s42
      %p46 = pneg %p40
      %p47 = scmp.eq.s32.totalorder %s17, 1
      %p48 = por %p46, %p47
      %p49 = scmp.ne.s32.totalorder %s41, %s44
      %p50 = scmp.eq.s32.totalorder %s17, 0
      %p51 = por %p49, %p50
      %p52 = scmp.ne.s32.totalorder %s41, %s44
      %p53 = scmp.eq.s32.totalorder %s22, 1
      %p54 = por %p52, %p53
      %p55 = scmp.ne.s32.totalorder %s44, %s45
      %p56 = scmp.eq.s32.totalorder %s22, 0
      %p57 = por %p55, %p56
      %p58 = scmp.ne.s32.totalorder %s44, %s45
      %p59 = scmp.eq.s32.totalorder %s23, 1
      %p60 = por %p58, %p59
      %p62 = scmp.ne.s32.totalorder %s45, %s61
      %p63 = scmp.eq.s32.totalorder %s23, 0
      %p64 = por %p62, %p63
      %s65 = ssub.s32 %s24, %s36
      %s66 = ssub.s32 %s25, %s32
      %s67 = sor.u32 %s65, %s66
      %p68 = scmp.eq.s32.totalorder %s67, 0
      %s70 = sadd.s32 %s69, 1
      %s71 = scalar_select %p68, %s69, %s70
      %p74 = pneg %p68
      %p75 = scmp.eq.s32.totalorder %s17, 1
      %p76 = por %p74, %p75
      %p77 = scmp.ne.s32.totalorder %s69, %s72
      %p78 = scmp.eq.s32.totalorder %s17, 0
      %p79 = por %p77, %p78
      %p80 = scmp.ne.s32.totalorder %s69, %s72
      %p81 = scmp.eq.s32.totalorder %s22, 1
      %p82 = por %p80, %p81
      %p83 = scmp.ne.s32.totalorder %s72, %s73
      %p84 = scmp.eq.s32.totalorder %s22, 0
      %p85 = por %p83, %p84
      %p86 = scmp.ne.s32.totalorder %s72, %s73
      %p87 = scmp.eq.s32.totalorder %s23, 1
      %p88 = por %p86, %p87
      %p90 = scmp.ne.s32.totalorder %s73, %s89
      %p91 = scmp.eq.s32.totalorder %s23, 0
      %p92 = por %p90, %p91
      %s93 = ssub.s32 %s24, %s36
      %s94 = ssub.s32 %s25, %s32
      %s95 = sor.u32 %s93, %s94
      %p96 = scmp.eq.s32.totalorder %s95, 0
      %s98 = sadd.s32 %s97, 1
      %s99 = scalar_select %p96, %s97, %s98
      %p102 = pneg %p96
      %p103 = scmp.eq.s32.totalorder %s17, 1
      %p104 = por %p102, %p103
      %p105 = scmp.ne.s32.totalorder %s97, %s100
      %p106 = scmp.eq.s32.totalorder %s17, 0
      %p107 = por %p105, %p106
      %p108 = scmp.ne.s32.totalorder %s97, %s100
      %p109 = scmp.eq.s32.totalorder %s22, 1
      %p110 = por %p108, %p109
      %p111 = scmp.ne.s32.totalorder %s100, %s101
      %p112 = scmp.eq.s32.totalorder %s22, 0
      %p113 = por %p111, %p112
      %p114 = scmp.ne.s32.totalorder %s100, %s101
      %p115 = scmp.eq.s32.totalorder %s23, 1
      %p116 = por %p114, %p115
      %p118 = scmp.ne.s32.totalorder %s101, %s117
      %p119 = scmp.eq.s32.totalorder %s23, 0
      %p120 = por %p118, %p119
      %p121 = scmp.le.s32.totalorder 1, %s17
      %p122 = scmp.lt.s32.totalorder %s17, 3
      %p123 = pnand %p121, %p122
      %p124 = pneg %p123
      // Predicated region
      $region9: #{tpu_custom_call.1} parent=5 // pred_check
        _
      $region10: #{tpu_custom_call.1} parent=5 // pred_check_branch
        %126 = sbr.rel (%p123) target = $region12
      $region11: #{tpu_custom_call.1} parent=5 // pred_region
        %s127 = ssub.s32 %s17, 1
      $region12: #{tpu_custom_call.1} parent=5 // pred_fallthru
        _
      %p128 = scmp.lt.s32.totalorder %s17, 2
      // Predicated region
      $region13: #{tpu_custom_call.1} parent=5 // pred_check
        %p129 = pneg %p128
      $region14: #{tpu_custom_call.1} parent=5 // pred_check_branch
        %131 = sbr.rel (%p129) target = $region16
      $region15: #{tpu_custom_call.1} parent=5 // pred_region
        // Predicated region
        $region17: #{tpu_custom_call.1} parent=15 // pred_check
          %p132 = pneg %p51
        $region18: #{tpu_custom_call.1} parent=15 // pred_check_branch
          %134 = sbr.rel (%p132) target = $region20
        $region19: #{tpu_custom_call.1} parent=15 // pred_region
          %s135 = sand.u32 %s41, 1
          %s136 = scalar_lea.sflag [#allocation3], %s135
          %s137 = sand.u32 %s41, 1
          %s138 = smul.addr %s137, 2
          %s139 = scalar_lea.vmem [#allocation2], %s138
          %s140 = smul.u32 2, %s25
          %s142 = ssub.s32 32, 32
          %143 = vsyncadd %s136, %s142
          %s144 = smul.addr %s24, 2
          %s145 = sadd.s32 %s140, %s144
          %s146 = smul.addr %s145, 16
          %s147 = scalar_lea.hbm %s0, %s146
          %s149 = sshll.u32 %s139, 4
          %s150 = int_to_ptr.vmem [resolvable:$true] %s149
          %152 = dma.hbm_to_vmem [thread:$0]  %s147, 32, %s150, %s136
        $region20: #{tpu_custom_call.1} parent=15 // pred_fallthru
          _
        // Predicated region
        $region21: #{tpu_custom_call.1} parent=15 // pred_check
          %p153 = pneg %p79
        $region22: #{tpu_custom_call.1} parent=15 // pred_check_branch
          %155 = sbr.rel (%p153) target = $region24
        $region23: #{tpu_custom_call.1} parent=15 // pred_region
          %s156 = sand.u32 %s69, 1
          %s157 = scalar_lea.sflag [#allocation6], %s156
          %s158 = sand.u32 %s69, 1
          %s159 = smul.addr %s158, 8
          %s160 = scalar_lea.vmem [#allocation5], %s159
          %s161 = smul.u32 2, %s25
          %s163 = ssub.s32 128, 128
          %164 = vsyncadd %s157, %s163
          %s165 = smul.addr %s24, 2
          %s166 = sadd.s32 %s161, %s165
          %s167 = smul.addr %s166, 64
          %s168 = scalar_lea.hbm %s1, %s167
          %s170 = sshll.u32 %s160, 4
          %s171 = int_to_ptr.vmem [resolvable:$true] %s170
          %173 = dma.hbm_to_vmem [thread:$0]  %s168, 128, %s171, %s157
        $region24: #{tpu_custom_call.1} parent=15 // pred_fallthru
          _
      $region16: #{tpu_custom_call.1} parent=5 // pred_fallthru
        _
      %p174 = scmp.le.s32.totalorder 1, %s17
      %p175 = scmp.lt.s32.totalorder %s17, 3
      %p176 = pnand %p174, %p175
      %p177 = pneg %p176
      // Predicated region
      $region25: #{tpu_custom_call.1} parent=5 // pred_check
        _
      $region26: #{tpu_custom_call.1} parent=5 // pred_check_branch
        %179 = sbr.rel (%p176) target = $region28
      $region27: #{tpu_custom_call.1} parent=5 // pred_region
        %s180 = ssub.s32 %s17, 1
        %s181 = sand.u32 %s44, 1
        %s182 = scalar_lea.sflag [#allocation3], %s181
        %s183 = sand.u32 %s44, 1
        %s184 = smul.addr %s183, 2
        %s185 = scalar_lea.vmem [#allocation2], %s184
        // Predicated region
        $region29: #{tpu_custom_call.1} parent=27 // pred_check
          %p186 = pneg %p57
        $region30: #{tpu_custom_call.1} parent=27 // pred_check_branch
          %188 = sbr.rel (%p186) target = $region32
        $region31: #{tpu_custom_call.1} parent=27 // pred_region
          %189 = dma.done %s182, 32
        $region32: #{tpu_custom_call.1} parent=27 // pred_fallthru
          _
        %s190 = sand.u32 %s72, 1
        %s191 = scalar_lea.sflag [#allocation6], %s190
        %s192 = sand.u32 %s72, 1
        %s193 = smul.addr %s192, 8
        %s194 = scalar_lea.vmem [#allocation5], %s193
        // Predicated region
        $region33: #{tpu_custom_call.1} parent=27 // pred_check
          %p195 = pneg %p85
        $region34: #{tpu_custom_call.1} parent=27 // pred_check_branch
          %197 = sbr.rel (%p195) target = $region36
        $region35: #{tpu_custom_call.1} parent=27 // pred_region
          %198 = dma.done %s191, 128
        $region36: #{tpu_custom_call.1} parent=27 // pred_fallthru
          _
        %s199 = sand.u32 %s44, 1
        %s200 = scalar_lea.sflag [#allocation3], %s199
        %s201 = sand.u32 %s44, 1
        %s202 = smul.addr %s201, 2
        %s203 = scalar_lea.vmem [#allocation2], %s202
        %p204 = pneg %p57
        %p205 = pneg %p54
        %s206 = sand.u32 %s72, 1
        %s207 = scalar_lea.sflag [#allocation6], %s206
        %s208 = sand.u32 %s72, 1
        %s209 = smul.addr %s208, 8
        %s210 = scalar_lea.vmem [#allocation5], %s209
        %p211 = pneg %p85
        %p212 = pneg %p82
        %p213 = pneg %p113
        %p214 = pneg %p110
        %s215 = sand.u32 %s100, 1
        %s216 = scalar_lea.sflag [#allocation4], %s215
        %s217 = sand.u32 %s100, 1
        %s218 = smul.addr %s217, 8
        %s219 = scalar_lea.vmem [#allocation7], %s218
        %s220 = smul.u32 2, %s27
        %s221 = smul.u32 2, %s27
        %v222 = vld [vmem:[%s194] sm:$0xff]
        %v223 = vld [vmem:[%s185] sm:$0x3]
        %v225 = vcombine.high %v222, %v222
        %vm227 = vcmask 1043456
        %v228 = vsel %vm227, %v222, -inf
        %v229 = vrot.slane %v228, 4
        %v230 = vmax.f32 %v228, %v229
        %v231 = vrot.slane %v230, 2
        %v232 = vmax.f32 %v230, %v231
        %v233 = vrot.slane %v232, 1
        %v234 = vmax.f32 %v232, %v233
        %v235 = vsel %vm227, %v225, -inf
        %v236 = vrot.slane %v235, 4
        %v237 = vmax.f32 %v235, %v236
        %v238 = vrot.slane %v237, 2
        %v239 = vmax.f32 %v237, %v238
        %v240 = vrot.slane %v239, 1
        %v241 = vmax.f32 %v239, %v240
        %v244 = vcombine.low %v234, %v241
        %v246 = vsub.f32 %v222, %v244
        %v247 = vmul.f32 %v246, 1.442695
        %v248 = vpow.pop %v247
        %v250 = vcombine.high %v248, %v248
        %v252 = vsel %vm227, %v248, 0.0
        %v253 = vrot.slane %v252, 4
        %v254 = vadd.f32 %v252, %v253
        %v255 = vrot.slane %v254, 2
        %v256 = vadd.f32 %v254, %v255
        %v257 = vrot.slane %v256, 1
        %v258 = vadd.f32 %v256, %v257
        %v259 = vsel %vm227, %v250, 0.0
        %v260 = vrot.slane %v259, 4
        %v261 = vadd.f32 %v259, %v260
        %v262 = vrot.slane %v261, 2
        %v263 = vadd.f32 %v261, %v262
        %v264 = vrot.slane %v263, 1
        %v265 = vadd.f32 %v263, %v264
        %v266 = vlog2.pop %v258
        %v267 = vmul.f32 %v266, 0.6931472
        %v268 = vlog2.pop %v265
        %v269 = vmul.f32 %v268, 0.6931472
        %v270 = vadd.f32 %v234, %v267
        %v271 = vadd.f32 %v241, %v269
        %v274 = vcombine.low %v270, %v271
        %v276 = vsub.f32 %v222, %v274
        %v277 = vlaneseq
        %v278 = vshrl.u32 %v277, 7
        %v279 = vlaneseq
        %v280 = vshrl.u32 %v279, 7
        %v281 = vsub.s32 0, %v280
        %v282 = vrot.slane %v223, %v281
        %v283 = vlaneseq
        %v284 = vshrl.u32 %v283, 7
        %v285 = vsub.s32 1, %v284
        %v286 = vrot.slane %v223, %v285
        %vm287 = vcmp.eq.s32.totalorder %v278, %v282
        %vm288 = vcmp.eq.s32.totalorder %v278, %v286
        %v290 = vcombine.high %v276, %v276
        %v292 = vsel %vm287, %v276, 0.0
        %v293 = vsel %vm288, %v290, 0.0
        %v294 = vsel %vm227, %v292, 0.0
        %v295 = vrot.slane %v294, 4
        %v296 = vadd.f32 %v294, %v295
        %v297 = vrot.slane %v296, 2
        %v298 = vadd.f32 %v296, %v297
        %v299 = vrot.slane %v298, 1
        %v300 = vadd.f32 %v298, %v299
        %v301 = vsel %vm227, %v293, 0.0
        %v302 = vrot.slane %v301, 4
        %v303 = vadd.f32 %v301, %v302
        %v304 = vrot.slane %v303, 2
        %v305 = vadd.f32 %v303, %v304
        %v306 = vrot.slane %v305, 1
        %v307 = vadd.f32 %v305, %v306
        %v308 = vsub.f32 0.0, %v300
        %v309 = vsub.f32 0.0, %v307
        %v310 = vmul.f32 %v300, 1.442695
        %v311 = vpow.pop %v310
        %v312 = vmul.f32 %v307, 1.442695
        %v313 = vpow.pop %v312
        %v314 = vsub.f32 1.0, %v311
        %v315 = vsub.f32 1.0, %v313
        %v316 = vmul.f32 %v314, 2.0
        %v317 = vmul.f32 %v315, 2.0
        %v318 = vadd.f32 %v308, %v316
        %v319 = vadd.f32 %v309, %v317
        %s320 = smul.u32 %s27, 256
        %v321 = vlaneseq
        %v322 = vand.u32 %v321, 127
        %v323 = vadd.s32 %v322, 128
        %v324 = vstv %s320
        %v325 = vadd.s32 %v324, %v322
        %v326 = vadd.s32 %v324, %v323
        %vm327 = vcmp.lt.s32.totalorder %v325, 256
        %vm328 = vcmp.lt.s32.totalorder %v326, 256
        %v329 = vsel %vm327, %v318, 0.0
        %v330 = vsel %vm328, %v319, 0.0
        %vm331 = vcmask 1040384
        %v332 = vsel %vm331, %v329, 0.0
        %v333 = vsel %vm331, %v330, 0.0
        %v334 = vadd.f32 %v332, %v333
        %335 = vadd.xlane.f32.xlu0 %v334
        %v336 = vpop.xlane.xlu0 %335
        %v337 = vrot.slane %v336, 4
        %v338 = vadd.f32 %v336, %v337
        %v339 = vrot.slane %v338, 2
        %v340 = vadd.f32 %v338, %v339
        %v341 = vrot.slane %v340, 1
        %v342 = vadd.f32 %v340, %v341
        %s343 = vtos %v342
        %v344 = vsel %vm327, 1, 0
        %v345 = vsel %vm328, 1, 0
        %v346 = vcvt.s32.f32 %v344
        %v347 = vcvt.s32.f32 %v345
        %v348 = vsel %vm331, %v346, 0.0
        %v349 = vsel %vm331, %v347, 0.0
        %v350 = vadd.f32 %v348, %v349
        %351 = vadd.xlane.f32.xlu0 %v350
        %v352 = vpop.xlane.xlu0 %351
        %v353 = vrot.slane %v352, 4
        %v354 = vadd.f32 %v352, %v353
        %v355 = vrot.slane %v354, 2
        %v356 = vadd.f32 %v354, %v355
        %v357 = vrot.slane %v356, 1
        %v358 = vadd.f32 %v356, %v357
        %s359 = vtos %v358
        %vm360 = vcmp.lt.s32.totalorder %v278, 4
        %v361 = vstv %s343
        %v362 = vstv %s359
        %v363 = vsel %vm360, %v361, %v362
        %364 = vst [vmem:[%s219] sm:$0xff] %v363
        %s365 = sand.u32 %s100, 1
        %s366 = scalar_lea.sflag [#allocation4], %s365
        %s367 = sand.u32 %s100, 1
        %s368 = smul.addr %s367, 8
        %s369 = scalar_lea.vmem [#allocation7], %s368
        // Predicated region
        $region37: #{tpu_custom_call.1} parent=27 // pred_check
          %p370 = pneg %p110
        $region38: #{tpu_custom_call.1} parent=27 // pred_check_branch
          %372 = sbr.rel (%p370) target = $region40
        $region39: #{tpu_custom_call.1} parent=27 // pred_region
          %s374 = ssub.s32 128, 128
          %375 = vsyncadd %s366, %s374
          %s376 = sadd.s32 %s27, %s26
          %s377 = smul.addr %s376, 128
          %s378 = scalar_lea.hbm %s2, %s377
          %s380 = sshll.u32 %s369, 4
          %s381 = int_to_ptr.vmem [resolvable:$true] %s380
          %383 = dma.vmem_to_hbm [thread:$0]  %s381, 128, %s378, %s366
        $region40: #{tpu_custom_call.1} parent=27 // pred_fallthru
          _
      $region28: #{tpu_custom_call.1} parent=5 // pred_fallthru
        _
      %p384 = scmp.le.s32.totalorder 2, %s17
      // Predicated region
      $region41: #{tpu_custom_call.1} parent=5 // pred_check
        %p385 = pneg %p384
      $region42: #{tpu_custom_call.1} parent=5 // pred_check_branch
        %387 = sbr.rel (%p385) target = $region44
      $region43: #{tpu_custom_call.1} parent=5 // pred_region
        %s388 = ssub.s32 %s17, 2
        // Predicated region
        $region45: #{tpu_custom_call.1} parent=43 // pred_check
          %p389 = pneg %p116
        $region46: #{tpu_custom_call.1} parent=43 // pred_check_branch
          %391 = sbr.rel (%p389) target = $region48
        $region47: #{tpu_custom_call.1} parent=43 // pred_region
          %s392 = sand.u32 %s101, 1
          %s393 = scalar_lea.sflag [#allocation4], %s392
          %s394 = sand.u32 %s101, 1
          %s395 = smul.addr %s394, 8
          %s396 = scalar_lea.vmem [#allocation7], %s395
          %397 = dma.done %s393, 128
        $region48: #{tpu_custom_call.1} parent=43 // pred_fallthru
          _
      $region44: #{tpu_custom_call.1} parent=5 // pred_fallthru
        _
    $region6: #{tpu_custom_call.1} parent=1 // loop_footer
      %s21 = sadd.s32 1, %s17
    $region7: #{tpu_custom_call.1} parent=1 // loop_footer_branch
      %16 = sbr.rel target = $region3
    $region8: #{tpu_custom_call.1} parent=1 // loop_exit
      _
    %398 = vsyncpa [#allocation3], 1
    %s399 = scalar_lea.sflag [#allocation3], 1
    %400 = vsyncpa %s399, 1
    %401 = vsyncpa [#allocation6], 1
    %s402 = scalar_lea.sflag [#allocation6], 1
    %403 = vsyncpa %s402, 1
    %404 = vsyncpa [#allocation4], 1
    %s405 = scalar_lea.sflag [#allocation4], 1
    %406 = vsyncpa %s405, 1

</llo_original>
